<compile_context>
chip_gen: v7x
topology: tpu7x:2x2x1
jax: 0.10.0
libtpu: 0.0.40
codegen_flags: <defaults>
</compile_context>

<pallas_src>
import jax
import jax.numpy as jnp
from jax.experimental import pallas as pl
from jax.experimental.pallas import tpu as pltpu


# --------------------------------------------------------------------------------------
# helpers
# --------------------------------------------------------------------------------------
def _round_up(x, m):
    return ((x + m - 1) // m) * m


def _choose_tc(t, max_tc):
    """Largest chunk size <= max_tc that divides t (keeps grids exact, no time padding)."""
    tc = min(max_tc, t)
    while t % tc:
        tc -= 1
    return tc


def _pad_gate_weight(w, hp, in_dim_pad=None):
    """PyTorch LSTM weight [4H, Din] -> padded+transposed [Din_p, 4*hp].

    Each gate block (i, f, g, o) is zero-padded from H to hp; the input dimension is
    optionally zero-padded (used when the layer consumes a padded hidden state). Zero
    padding keeps padded hidden channels exactly 0 through the recurrence.
    """
    four_h, d_in = w.shape
    h = four_h // 4
    d_p = d_in if in_dim_pad is None else in_dim_pad
    w4 = w.reshape(4, h, d_in)
    w4 = jnp.pad(w4, ((0, 0), (0, hp - h), (0, d_p - d_in)))
    return jnp.transpose(w4.reshape(4 * hp, d_p))           # [Din_p, 4*hp]


def _pad_gate_bias(b, hp):
    """Combined LSTM bias [4H] -> [1, 4*hp] f32, per-gate zero padded."""
    four_h = b.shape[0]
    h = four_h // 4
    b4 = jnp.pad(b.reshape(4, h).astype(jnp.float32), ((0, 0), (0, hp - h)))
    return b4.reshape(1, 4 * hp)


def _lstm_cell(gates, c, hp):
    # hp is a multiple of 128, so these lane slices are vreg-aligned (no lane shuffles).
    i_g = jax.nn.sigmoid(gates[:, 0 * hp:1 * hp])
    f_g = jax.nn.sigmoid(gates[:, 1 * hp:2 * hp])
    g_g = jnp.tanh(gates[:, 2 * hp:3 * hp])
    o_g = jax.nn.sigmoid(gates[:, 3 * hp:4 * hp])
    c_new = f_g * c + i_g * g_g
    h_new = o_g * jnp.tanh(c_new)
    return h_new, c_new


# --------------------------------------------------------------------------------------
# Row-tiled projection + log_softmax kernel (consumes bf16 h2 directly).
# --------------------------------------------------------------------------------------
def _proj_logsoftmax_kernel(x_ref, w_ref, b_ref, o_ref):
    logits = (jnp.dot(x_ref[...], w_ref[...], preferred_element_type=jnp.float32)
              + b_ref[...])                                  # [rt, VP] (padded cols ~ -1e30)
    m = jnp.max(logits, axis=-1, keepdims=True)
    z = logits - m
    lse = jnp.log(jnp.sum(jnp.exp(z), axis=-1, keepdims=True))
    o_ref[...] = z - lse


def _proj_logsoftmax(x2d_bf16, w_bf16, b_f32, row_tile=512):
    n, d_in = x2d_bf16.shape
    cols = w_bf16.shape[1]
    rt = min(row_tile, _round_up(n, 8))
    n_pad = _round_up(n, rt)
    x_p = x2d_bf16 if n_pad == n else jnp.pad(x2d_bf16, ((0, n_pad - n), (0, 0)))
    out = pl.pallas_call(
        _proj_logsoftmax_kernel,
        out_shape=jax.ShapeDtypeStruct((n_pad, cols), jnp.float32),
        grid=(n_pad // rt,),
        in_specs=[pl.BlockSpec((rt, d_in), lambda i: (i, 0)),
                  pl.BlockSpec((d_in, cols), lambda i: (0, 0)),
                  pl.BlockSpec((1, cols), lambda i: (0, 0))],
        out_specs=pl.BlockSpec((rt, cols), lambda i: (i, 0)),
        compiler_params=pltpu.CompilerParams(dimension_semantics=("parallel",)),
    )(x_p, w_bf16, b_f32)
    return out if n_pad == n else out[:n]


# --------------------------------------------------------------------------------------
# Fused single-layer LSTM recurrence (encoder), final hidden state only.
# Per chunk: one [tc*BP, D] @ [D, 4HP] gate precompute into VMEM scratch, then a fully
# unrolled step loop doing h @ W_hh + elementwise. h/c persist in f32 VMEM scratch.
# --------------------------------------------------------------------------------------
def _make_lstm_final_kernel(tc, d_in, bp, hp):
    g = 4 * hp

    def kernel(x_ref, wih_ref, whh_ref, b_ref, hout_ref, gx_scr, h_scr, c_scr):
        @pl.when(pl.program_id(0) == 0)
        def _init():
            h_scr[...] = jnp.zeros_like(h_scr)
            c_scr[...] = jnp.zeros_like(c_scr)

        # fused input projection for the whole chunk (bf16 MXU, f32 accumulate).
        gx_scr[...] = (jnp.dot(x_ref[...].reshape(tc * bp, d_in), wih_ref[...],
                               preferred_element_type=jnp.float32)
                       + b_ref[...]).reshape(tc, bp, g)

        def step(t, carry):
            h, c = carry
            # whh_ref loaded inside the loop: keep weights in VMEM, not pinned in vregs.
            gates = gx_scr[t] + jnp.dot(h.astype(jnp.bfloat16), whh_ref[...],
                                        preferred_element_type=jnp.float32)
            return _lstm_cell(gates, c, hp)

        h, c = jax.lax.fori_loop(0, tc, step, (h_scr[...], c_scr[...]), unroll=True)
        h_scr[...] = h
        c_scr[...] = c

        @pl.when(pl.program_id(0) == pl.num_programs(0) - 1)
        def _finalize():
            hout_ref[...] = h            # only the final hidden state ever hits HBM

    return kernel


def _run_lstm_final(x_tbd_bf16, wih_t, whh_t, bias, hp, time_chunk=32):
    """x: [T, BP, Din] bf16 (batch padded to mult of 8) -> final h: [BP, hp] f32."""
    T, BP, Din = x_tbd_bf16.shape
    G = 4 * hp
    tc = _choose_tc(T, time_chunk)
    return pl.pallas_call(
        _make_lstm_final_kernel(tc, Din, BP, hp),
        out_shape=jax.ShapeDtypeStruct((BP, hp), jnp.float32),
        grid_spec=pltpu.PrefetchScalarGridSpec(
            num_scalar_prefetch=0,
            grid=(T // tc,),
            in_specs=[pl.BlockSpec((tc, BP, Din), lambda c: (c, 0, 0)),
                      pl.BlockSpec((Din, G), lambda c: (0, 0)),
                      pl.BlockSpec((hp, G), lambda c: (0, 0)),
                      pl.BlockSpec((1, G), lambda c: (0, 0))],
            out_specs=pl.BlockSpec((BP, hp), lambda c: (0, 0)),
            scratch_shapes=[pltpu.VMEM((tc, BP, G), jnp.float32),
                            pltpu.VMEM((BP, hp), jnp.float32),
                            pltpu.VMEM((BP, hp), jnp.float32)],
        ),
        compiler_params=pltpu.CompilerParams(
            dimension_semantics=("arbitrary",)),     # recurrence => sequential chunks
    )(x_tbd_bf16, wih_t, whh_t, bias)


# --------------------------------------------------------------------------------------
# Fused 2-layer LSTM recurrence (Two_Lstm): layer-2 consumes layer-1's h in-register.
# Layer-2 matmul packed to K = 2*HP via concat([h1_new, h2]) @ [W_ih2; W_hh2].
# Output h2 is emitted as bf16 (direct MXU operand for the projection kernel).
# --------------------------------------------------------------------------------------
def _make_lstm2_chunk_kernel(tc, d_in, bp, hp):
    g = 4 * hp

    def kernel(x_ref, wih1_ref, whh1_ref, b1_ref, w2cat_ref, b2_ref, out_ref,
               gx1_scr, h1_scr, c1_scr, h2_scr, c2_scr):
        @pl.when(pl.program_id(0) == 0)
        def _init():
            for r in (h1_scr, c1_scr, h2_scr, c2_scr):
                r[...] = jnp.zeros_like(r)

        # layer-1 input projection for the whole chunk (x is D-wide; no gx HBM traffic).
        gx1_scr[...] = (jnp.dot(x_ref[...].reshape(tc * bp, d_in), wih1_ref[...],
                                preferred_element_type=jnp.float32)
                        + b1_ref[...]).reshape(tc, bp, g)

        def step(t, carry):
            h1, c1, h2, c2 = carry
            g1 = gx1_scr[t] + jnp.dot(h1.astype(jnp.bfloat16), whh1_ref[...],
                                      preferred_element_type=jnp.float32)
            h1n, c1n = _lstm_cell(g1, c1, hp)
            lhs2 = jnp.concatenate([h1n.astype(jnp.bfloat16),
                                    h2.astype(jnp.bfloat16)], axis=-1)   # [bp, 2*hp]
            g2 = b2_ref[...] + jnp.dot(lhs2, w2cat_ref[...],
                                       preferred_element_type=jnp.float32)
            h2n, c2n = _lstm_cell(g2, c2, hp)
            out_ref[t] = h2n.astype(jnp.bfloat16)
            return h1n, c1n, h2n, c2n

        h1, c1, h2, c2 = jax.lax.fori_loop(
            0, tc, step,
            (h1_scr[...], c1_scr[...], h2_scr[...], c2_scr[...]), unroll=True)
        h1_scr[...] = h1
        c1_scr[...] = c1
        h2_scr[...] = h2
        c2_scr[...] = c2

    return kernel


def _run_lstm_two_layer(x_tbd_bf16, l1_wih_t, l1_whh_t, l1_b, w2cat, l2_b, hp,
                        time_chunk=32):
    """x: [T, BP, Din] bf16 -> top-layer h2: [T, BP, hp] bf16 (fused 2-layer LSTM)."""
    T, BP, Din = x_tbd_bf16.shape
    G = 4 * hp
    tc = _choose_tc(T, time_chunk)
    return pl.pallas_call(
        _make_lstm2_chunk_kernel(tc, Din, BP, hp),
        out_shape=jax.ShapeDtypeStruct((T, BP, hp), jnp.bfloat16),
        grid_spec=pltpu.PrefetchScalarGridSpec(
            num_scalar_prefetch=0,
            grid=(T // tc,),
            in_specs=[pl.BlockSpec((tc, BP, Din), lambda c: (c, 0, 0)),
                      pl.BlockSpec((Din, G), lambda c: (0, 0)),
                      pl.BlockSpec((hp, G), lambda c: (0, 0)),
                      pl.BlockSpec((1, G), lambda c: (0, 0)),
                      pl.BlockSpec((2 * hp, G), lambda c: (0, 0)),
                      pl.BlockSpec((1, G), lambda c: (0, 0))],
            out_specs=pl.BlockSpec((tc, BP, hp), lambda c: (c, 0, 0)),
            scratch_shapes=[pltpu.VMEM((tc, BP, G), jnp.float32),
                            pltpu.VMEM((BP, hp), jnp.float32),
                            pltpu.VMEM((BP, hp), jnp.float32),
                            pltpu.VMEM((BP, hp), jnp.float32),
                            pltpu.VMEM((BP, hp), jnp.float32)],
        ),
        compiler_params=pltpu.CompilerParams(
            dimension_semantics=("arbitrary",)),
    )(x_tbd_bf16, l1_wih_t, l1_whh_t, l1_b, w2cat, l2_b)


# --------------------------------------------------------------------------------------
# Full forward pass (matches CTC_Hieratical_LSTM.forward semantics).
# --------------------------------------------------------------------------------------
def ctc_hieratical_lstm_forward(vid_feats, params, duration, vid_duration):
    B, T, D = vid_feats.shape
    H = params['l1_w_hh'].shape[1]
    V = params['proj_w'].shape[0]
    HP = _round_up(H, 128)            # lane-dense hidden (padded channels stay exactly 0)
    VP = _round_up(V, 128)            # lane-dense vocab (padded logits forced to -inf)
    BP = _round_up(B, 8)              # sublane-dense batch
    bf16, f32 = jnp.bfloat16, jnp.float32

    # ---- padded / transposed parameters (bf16 MXU operands, f32 biases) ----
    enc_wih_t = _pad_gate_weight(params['enc_w_ih'], HP).astype(bf16)                 # [D, G]
    enc_whh_t = _pad_gate_weight(params['enc_w_hh'], HP, in_dim_pad=HP).astype(bf16)  # [HP, G]
    enc_b = _pad_gate_bias(params['enc_b_ih'] + params['enc_b_hh'], HP)               # [1, G]

    l1_wih_t = _pad_gate_weight(params['l1_w_ih'], HP).astype(bf16)
    l1_whh_t = _pad_gate_weight(params['l1_w_hh'], HP, in_dim_pad=HP).astype(bf16)
    l1_b = _pad_gate_bias(params['l1_b_ih'] + params['l1_b_hh'], HP)

    # layer-2: pack W_ih2 (consumed by h1_new) and W_hh2 (consumed by h2) into one
    # [2*HP, 4*HP] operand -> one K=2*HP matmul per step instead of two K=HP matmuls.
    l2_wih_t = _pad_gate_weight(params['l2_w_ih'], HP, in_dim_pad=HP)
    l2_whh_t = _pad_gate_weight(params['l2_w_hh'], HP, in_dim_pad=HP)
    l2_wcat = jnp.concatenate([l2_wih_t, l2_whh_t], axis=0).astype(bf16)              # [2HP, G]
    l2_b = _pad_gate_bias(params['l2_b_ih'] + params['l2_b_hh'], HP)

    proj_w_t = jnp.transpose(
        jnp.pad(params['proj_w'], ((0, VP - V), (0, HP - H)))).astype(bf16)           # [HP, VP]
    proj_b = jnp.pad(params['proj_b'].astype(f32), (0, VP - V),
                     constant_values=-1e30).reshape(1, VP)

    # ---- windowed encoder pass: all windows batched into ONE recurrence call ----
    # (the reference computes l2_input but only returns Two_Lstm(vid_feats); we keep
    #  producing it with identical values / ordering.)
    starts = list(range(1, vid_duration - duration + 1, int(duration / 2)))
    n_win = len(starts)
    if n_win > 0:
        win_idx = jnp.asarray([[s + d for d in range(duration)] for s in starts],
                              dtype=jnp.int32)                              # [n_win, duration]
        wins = jnp.take(vid_feats, win_idx.reshape(-1), axis=1)             # [B, n_win*dur, D]
        wins = wins.reshape(B, n_win, duration, D)
        wins = jnp.transpose(wins, (2, 1, 0, 3)).reshape(duration, n_win * B, D)
        NB = n_win * B
        NBP = _round_up(NB, 8)
        wins = jnp.pad(wins, ((0, 0), (0, NBP - NB), (0, 0))).astype(bf16)  # [dur, NBP, D]
        h_fin = _run_lstm_final(wins, enc_wih_t, enc_whh_t, enc_b, HP)      # [NBP, HP] f32
        h_fin = h_fin[:NB, :H]                                              # h_n: [NB, H]
        l2_input = jnp.transpose(h_fin.reshape(n_win, B, H), (1, 0, 2))     # [B, n_win, H]
    else:
        # duration == vid_duration -> no windows; reference loop would also be empty.
        l2_input = jnp.zeros((B, 0, H), dtype=f32)

    # ---- Two_Lstm(vid_feats): fused 2-layer LSTM + linear + log_softmax (returned) ----
    x_td = jnp.transpose(vid_feats, (1, 0, 2))                              # [T, B, D]
    x_td = jnp.pad(x_td, ((0, 0), (0, BP - B), (0, 0))).astype(bf16)        # [T, BP, D]
    h2 = _run_lstm_two_layer(x_td, l1_wih_t, l1_whh_t, l1_b,
                             l2_wcat, l2_b, HP)                             # [T, BP, HP] bf16
    logp = _proj_logsoftmax(h2.reshape(T * BP, HP), proj_w_t, proj_b)       # [T*BP, VP] f32
    logp = logp.reshape(T, BP, VP)[:, :B, :V]
    seq_logprobs = jnp.transpose(logp, (1, 0, 2))                           # [B, T, V]
    return seq_logprobs, l2_input


if __name__ == "__main__":
    key = jax.random.PRNGKey(0)
    B, T, D = 2, 8, 32            # batch, seq_len (=vid_duration), dim_vid
    H, V = 32, 16                 # dim_hidden, dim_voc
    duration, vid_duration = 4, T

    keys = jax.random.split(key, 16)

    def init(k, shape, scale=0.1):
        return jax.random.normal(k, shape, dtype=jnp.float32) * scale

    params = {
        # encoder LSTM (dim_vid -> dim_hidden)
        'enc_w_ih': init(keys[0], (4 * H, D)),
        'enc_w_hh': init(keys[1], (4 * H, H)),
        'enc_b_ih': init(keys[2], (4 * H,)),
        'enc_b_hh': init(keys[3], (4 * H,)),
        # Two_Lstm layer 1 (dim_vid -> dim_hidden)
        'l1_w_ih': init(keys[4], (4 * H, D)),
        'l1_w_hh': init(keys[5], (4 * H, H)),
        'l1_b_ih': init(keys[6], (4 * H,)),
        'l1_b_hh': init(keys[7], (4 * H,)),
        # Two_Lstm layer 2 (dim_hidden -> dim_hidden)
        'l2_w_ih': init(keys[8], (4 * H, H)),
        'l2_w_hh': init(keys[9], (4 * H, H)),
        'l2_b_ih': init(keys[10], (4 * H,)),
        'l2_b_hh': init(keys[11], (4 * H,)),
        # CTC projection head (dim_hidden -> dim_voc)
        'proj_w': init(keys[12], (V, H)),
        'proj_b': init(keys[13], (V,)),
    }

    vid_feats = jax.random.normal(keys[14], (B, T, D), dtype=jnp.float32)

    seq_logprobs, l2_input = ctc_hieratical_lstm_forward(
        vid_feats, params, duration, vid_duration)
    jax.block_until_ready((seq_logprobs, l2_input))

    n_windows = len(range(1, vid_duration - duration + 1, duration // 2))
    assert seq_logprobs.shape == (B, T, V)
    assert l2_input.shape == (B, n_windows, H)
    assert bool(jnp.all(jnp.isfinite(seq_logprobs)))
    print("KERNEL_OK")
</pallas_src>

<mosaic_0001>
module attributes {stable_mosaic.version = 11 : i64} {
  func.func @kernel(%arg0: i32, %arg1: memref<4x8x32xbf16, #tpu.memory_space<vmem>>, %arg2: memref<32x512xbf16, #tpu.memory_space<vmem>>, %arg3: memref<128x512xbf16, #tpu.memory_space<vmem>>, %arg4: memref<1x512xf32, #tpu.memory_space<vmem>>, %arg5: memref<8x128xf32, #tpu.memory_space<vmem>>, %arg6: memref<4x8x512xf32, #tpu.memory_space<vmem>>, %arg7: memref<8x128xf32, #tpu.memory_space<vmem>>, %arg8: memref<8x128xf32, #tpu.memory_space<vmem>>) attributes {dimension_semantics = [#tpu.dimension_semantics<arbitrary>], iteration_bounds = array<i64: 1>, scalar_prefetch = 0 : i64, scratch_operands = 3 : i64, tpu.core_type = #tpu.core_type<tc>, window_params = [{transform_indices = @transform_0, window_bounds = array<i64: 4, 8, 32>}, {pipeline_mode = #tpu.pipeline_mode<synchronous>, transform_indices = @transform_1, window_bounds = array<i64: 32, 512>}, {pipeline_mode = #tpu.pipeline_mode<synchronous>, transform_indices = @transform_2, window_bounds = array<i64: 128, 512>}, {pipeline_mode = #tpu.pipeline_mode<synchronous>, transform_indices = @transform_3, window_bounds = array<i64: 1, 512>}, {pipeline_mode = #tpu.pipeline_mode<synchronous>, transform_indices = @transform_4, window_bounds = array<i64: 8, 128>}]} {
    %c0_i32 = arith.constant 0 : i32
    %0 = arith.cmpi eq, %arg0, %c0_i32 : i32
    %1 = arith.extui %0 : i1 to i32
    %c0_i32_0 = arith.constant 0 : i32
    %2 = arith.cmpi ne, %1, %c0_i32_0 : i32
    scf.if %2 {
      %cst_53 = arith.constant 0.000000e+00 : f32
      %147 = vector.broadcast %cst_53 : f32 to vector<8x128xf32>
      %c0_54 = arith.constant 0 : index
      %c0_55 = arith.constant 0 : index
      %148 = vector.load %arg7[%c0_54, %c0_55] : memref<8x128xf32, #tpu.memory_space<vmem>>, vector<8x128xf32>
      tpu.vector_store %arg7[%c0_54, %c0_55], %147 {strides = array<i32>} : memref<8x128xf32, #tpu.memory_space<vmem>>, vector<8x128xf32>,
      %cst_56 = arith.constant 0.000000e+00 : f32
      %149 = vector.broadcast %cst_56 : f32 to vector<8x128xf32>
      %c0_57 = arith.constant 0 : index
      %c0_58 = arith.constant 0 : index
      %150 = vector.load %arg8[%c0_57, %c0_58] : memref<8x128xf32, #tpu.memory_space<vmem>>, vector<8x128xf32>
      tpu.vector_store %arg8[%c0_57, %c0_58], %149 {strides = array<i32>} : memref<8x128xf32, #tpu.memory_space<vmem>>, vector<8x128xf32>,
    } else {
    }
    %c0 = arith.constant 0 : index
    %c0_1 = arith.constant 0 : index
    %c0_2 = arith.constant 0 : index
    %3 = vector.load %arg1[%c0, %c0_1, %c0_2] : memref<4x8x32xbf16, #tpu.memory_space<vmem>>, vector<4x8x32xbf16>
    %4 = vector.shape_cast %3 : vector<4x8x32xbf16> to vector<32x32xbf16>
    %c0_3 = arith.constant 0 : index
    %c0_4 = arith.constant 0 : index
    %5 = vector.load %arg2[%c0_3, %c0_4] : memref<32x512xbf16, #tpu.memory_space<vmem>>, vector<32x512xbf16>
    %cst = arith.constant dense<0.000000e+00> : vector<32x512xf32>
    %6 = tpu.matmul %4, %5, %cst {dimension_numbers = #tpu.dot_dimension_numbers<[1], [0], [0], [1], [0, 0, 1, 1], [], []>} : vector<32x32xbf16>, vector<32x512xbf16>, vector<32x512xf32> -> vector<32x512xf32>
    %c0_5 = arith.constant 0 : index
    %c0_6 = arith.constant 0 : index
    %7 = vector.load %arg4[%c0_5, %c0_6] : memref<1x512xf32, #tpu.memory_space<vmem>>, vector<1x512xf32>
    %8 = vector.broadcast %7 : vector<1x512xf32> to vector<32x512xf32>
    %9 = arith.addf %6, %8 : vector<32x512xf32>
    %10 = vector.shape_cast %9 : vector<32x512xf32> to vector<4x8x512xf32>
    %c0_7 = arith.constant 0 : index
    %c0_8 = arith.constant 0 : index
    %c0_9 = arith.constant 0 : index
    %11 = vector.load %arg6[%c0_7, %c0_8, %c0_9] : memref<4x8x512xf32, #tpu.memory_space<vmem>>, vector<4x8x512xf32>
    tpu.vector_store %arg6[%c0_7, %c0_8, %c0_9], %10 {strides = array<i32>} : memref<4x8x512xf32, #tpu.memory_space<vmem>>, vector<4x8x512xf32>,
    %c0_10 = arith.constant 0 : index
    %c0_11 = arith.constant 0 : index
    %12 = vector.load %arg7[%c0_10, %c0_11] : memref<8x128xf32, #tpu.memory_space<vmem>>, vector<8x128xf32>
    %c0_12 = arith.constant 0 : index
    %c0_13 = arith.constant 0 : index
    %13 = vector.load %arg8[%c0_12, %c0_13] : memref<8x128xf32, #tpu.memory_space<vmem>>, vector<8x128xf32>
    %c0_i32_14 = arith.constant 0 : i32
    %14 = arith.index_cast %c0_i32_14 : i32 to index
    %c0_15 = arith.constant 0 : index
    %c0_16 = arith.constant 0 : index
    %15 = vector.load %arg6[%14, %c0_15, %c0_16] : memref<4x8x512xf32, #tpu.memory_space<vmem>>, vector<1x8x512xf32>
    %16 = vector.shape_cast %15 : vector<1x8x512xf32> to vector<8x512xf32>
    %17 = arith.truncf %12 : vector<8x128xf32> to vector<8x128xbf16>
    %c0_17 = arith.constant 0 : index
    %c0_18 = arith.constant 0 : index
    %18 = vector.load %arg3[%c0_17, %c0_18] : memref<128x512xbf16, #tpu.memory_space<vmem>>, vector<128x512xbf16>
    %cst_19 = arith.constant dense<0.000000e+00> : vector<8x512xf32>
    %19 = tpu.matmul %17, %18, %cst_19 {dimension_numbers = #tpu.dot_dimension_numbers<[1], [0], [0], [1], [0, 0, 1, 1], [], []>} : vector<8x128xbf16>, vector<128x512xbf16>, vector<8x512xf32> -> vector<8x512xf32>
    %20 = arith.addf %16, %19 : vector<8x512xf32>
    %21 = vector.extract_strided_slice %20 {offsets = [0, 0], sizes = [8, 128], strides = [1, 1]} : vector<8x512xf32> to vector<8x128xf32>
    %22 = arith.negf %21 : vector<8x128xf32>
    %23 = math.exp %22 : vector<8x128xf32>
    %cst_20 = arith.constant 1.000000e+00 : f32
    %24 = vector.broadcast %cst_20 : f32 to vector<8x128xf32>
    %25 = arith.addf %24, %23 : vector<8x128xf32>
    %26 = arith.divf %24, %25 : vector<8x128xf32>
    %27 = vector.extract_strided_slice %20 {offsets = [0, 128], sizes = [8, 128], strides = [1, 1]} : vector<8x512xf32> to vector<8x128xf32>
    %28 = arith.negf %27 : vector<8x128xf32>
    %29 = math.exp %28 : vector<8x128xf32>
    %cst_21 = arith.constant 1.000000e+00 : f32
    %30 = vector.broadcast %cst_21 : f32 to vector<8x128xf32>
    %31 = arith.addf %30, %29 : vector<8x128xf32>
    %32 = arith.divf %30, %31 : vector<8x128xf32>
    %33 = vector.extract_strided_slice %20 {offsets = [0, 256], sizes = [8, 128], strides = [1, 1]} : vector<8x512xf32> to vector<8x128xf32>
    %34 = math.tanh %33 : vector<8x128xf32>
    %35 = vector.extract_strided_slice %20 {offsets = [0, 384], sizes = [8, 128], strides = [1, 1]} : vector<8x512xf32> to vector<8x128xf32>
    %36 = arith.negf %35 : vector<8x128xf32>
    %37 = math.exp %36 : vector<8x128xf32>
    %cst_22 = arith.constant 1.000000e+00 : f32
    %38 = vector.broadcast %cst_22 : f32 to vector<8x128xf32>
    %39 = arith.addf %38, %37 : vector<8x128xf32>
    %40 = arith.divf %38, %39 : vector<8x128xf32>
    %41 = arith.mulf %32, %13 : vector<8x128xf32>
    %42 = arith.mulf %26, %34 : vector<8x128xf32>
    %43 = arith.addf %41, %42 : vector<8x128xf32>
    %44 = math.tanh %43 : vector<8x128xf32>
    %45 = arith.mulf %40, %44 : vector<8x128xf32>
    %c1_i32 = arith.constant 1 : i32
    %46 = arith.index_cast %c1_i32 : i32 to index
    %c0_23 = arith.constant 0 : index
    %c0_24 = arith.constant 0 : index
    %47 = vector.load %arg6[%46, %c0_23, %c0_24] : memref<4x8x512xf32, #tpu.memory_space<vmem>>, vector<1x8x512xf32>
    %48 = vector.shape_cast %47 : vector<1x8x512xf32> to vector<8x512xf32>
    %49 = arith.truncf %45 : vector<8x128xf32> to vector<8x128xbf16>
    %c0_25 = arith.constant 0 : index
    %c0_26 = arith.constant 0 : index
    %50 = vector.load %arg3[%c0_25, %c0_26] : memref<128x512xbf16, #tpu.memory_space<vmem>>, vector<128x512xbf16>
    %cst_27 = arith.constant dense<0.000000e+00> : vector<8x512xf32>
    %51 = tpu.matmul %49, %50, %cst_27 {dimension_numbers = #tpu.dot_dimension_numbers<[1], [0], [0], [1], [0, 0, 1, 1], [], []>} : vector<8x128xbf16>, vector<128x512xbf16>, vector<8x512xf32> -> vector<8x512xf32>
    %52 = arith.addf %48, %51 : vector<8x512xf32>
    %53 = vector.extract_strided_slice %52 {offsets = [0, 0], sizes = [8, 128], strides = [1, 1]} : vector<8x512xf32> to vector<8x128xf32>
    %54 = arith.negf %53 : vector<8x128xf32>
    %55 = math.exp %54 : vector<8x128xf32>
    %cst_28 = arith.constant 1.000000e+00 : f32
    %56 = vector.broadcast %cst_28 : f32 to vector<8x128xf32>
    %57 = arith.addf %56, %55 : vector<8x128xf32>
    %58 = arith.divf %56, %57 : vector<8x128xf32>
    %59 = vector.extract_strided_slice %52 {offsets = [0, 128], sizes = [8, 128], strides = [1, 1]} : vector<8x512xf32> to vector<8x128xf32>
    %60 = arith.negf %59 : vector<8x128xf32>
    %61 = math.exp %60 : vector<8x128xf32>
    %cst_29 = arith.constant 1.000000e+00 : f32
    %62 = vector.broadcast %cst_29 : f32 to vector<8x128xf32>
    %63 = arith.addf %62, %61 : vector<8x128xf32>
    %64 = arith.divf %62, %63 : vector<8x128xf32>
    %65 = vector.extract_strided_slice %52 {offsets = [0, 256], sizes = [8, 128], strides = [1, 1]} : vector<8x512xf32> to vector<8x128xf32>
    %66 = math.tanh %65 : vector<8x128xf32>
    %67 = vector.extract_strided_slice %52 {offsets = [0, 384], sizes = [8, 128], strides = [1, 1]} : vector<8x512xf32> to vector<8x128xf32>
    %68 = arith.negf %67 : vector<8x128xf32>
    %69 = math.exp %68 : vector<8x128xf32>
    %cst_30 = arith.constant 1.000000e+00 : f32
    %70 = vector.broadcast %cst_30 : f32 to vector<8x128xf32>
    %71 = arith.addf %70, %69 : vector<8x128xf32>
    %72 = arith.divf %70, %71 : vector<8x128xf32>
    %73 = arith.mulf %64, %43 : vector<8x128xf32>
    %74 = arith.mulf %58, %66 : vector<8x128xf32>
    %75 = arith.addf %73, %74 : vector<8x128xf32>
    %76 = math.tanh %75 : vector<8x128xf32>
    %77 = arith.mulf %72, %76 : vector<8x128xf32>
    %c2_i32 = arith.constant 2 : i32
    %78 = arith.index_cast %c2_i32 : i32 to index
    %c0_31 = arith.constant 0 : index
    %c0_32 = arith.constant 0 : index
    %79 = vector.load %arg6[%78, %c0_31, %c0_32] : memref<4x8x512xf32, #tpu.memory_space<vmem>>, vector<1x8x512xf32>
    %80 = vector.shape_cast %79 : vector<1x8x512xf32> to vector<8x512xf32>
    %81 = arith.truncf %77 : vector<8x128xf32> to vector<8x128xbf16>
    %c0_33 = arith.constant 0 : index
    %c0_34 = arith.constant 0 : index
    %82 = vector.load %arg3[%c0_33, %c0_34] : memref<128x512xbf16, #tpu.memory_space<vmem>>, vector<128x512xbf16>
    %cst_35 = arith.constant dense<0.000000e+00> : vector<8x512xf32>
    %83 = tpu.matmul %81, %82, %cst_35 {dimension_numbers = #tpu.dot_dimension_numbers<[1], [0], [0], [1], [0, 0, 1, 1], [], []>} : vector<8x128xbf16>, vector<128x512xbf16>, vector<8x512xf32> -> vector<8x512xf32>
    %84 = arith.addf %80, %83 : vector<8x512xf32>
    %85 = vector.extract_strided_slice %84 {offsets = [0, 0], sizes = [8, 128], strides = [1, 1]} : vector<8x512xf32> to vector<8x128xf32>
    %86 = arith.negf %85 : vector<8x128xf32>
    %87 = math.exp %86 : vector<8x128xf32>
    %cst_36 = arith.constant 1.000000e+00 : f32
    %88 = vector.broadcast %cst_36 : f32 to vector<8x128xf32>
    %89 = arith.addf %88, %87 : vector<8x128xf32>
    %90 = arith.divf %88, %89 : vector<8x128xf32>
    %91 = vector.extract_strided_slice %84 {offsets = [0, 128], sizes = [8, 128], strides = [1, 1]} : vector<8x512xf32> to vector<8x128xf32>
    %92 = arith.negf %91 : vector<8x128xf32>
    %93 = math.exp %92 : vector<8x128xf32>
    %cst_37 = arith.constant 1.000000e+00 : f32
    %94 = vector.broadcast %cst_37 : f32 to vector<8x128xf32>
    %95 = arith.addf %94, %93 : vector<8x128xf32>
    %96 = arith.divf %94, %95 : vector<8x128xf32>
    %97 = vector.extract_strided_slice %84 {offsets = [0, 256], sizes = [8, 128], strides = [1, 1]} : vector<8x512xf32> to vector<8x128xf32>
    %98 = math.tanh %97 : vector<8x128xf32>
    %99 = vector.extract_strided_slice %84 {offsets = [0, 384], sizes = [8, 128], strides = [1, 1]} : vector<8x512xf32> to vector<8x128xf32>
    %100 = arith.negf %99 : vector<8x128xf32>
    %101 = math.exp %100 : vector<8x128xf32>
    %cst_38 = arith.constant 1.000000e+00 : f32
    %102 = vector.broadcast %cst_38 : f32 to vector<8x128xf32>
    %103 = arith.addf %102, %101 : vector<8x128xf32>
    %104 = arith.divf %102, %103 : vector<8x128xf32>
    %105 = arith.mulf %96, %75 : vector<8x128xf32>
    %106 = arith.mulf %90, %98 : vector<8x128xf32>
    %107 = arith.addf %105, %106 : vector<8x128xf32>
    %108 = math.tanh %107 : vector<8x128xf32>
    %109 = arith.mulf %104, %108 : vector<8x128xf32>
    %c3_i32 = arith.constant 3 : i32
    %110 = arith.index_cast %c3_i32 : i32 to index
    %c0_39 = arith.constant 0 : index
    %c0_40 = arith.constant 0 : index
    %111 = vector.load %arg6[%110, %c0_39, %c0_40] : memref<4x8x512xf32, #tpu.memory_space<vmem>>, vector<1x8x512xf32>
    %112 = vector.shape_cast %111 : vector<1x8x512xf32> to vector<8x512xf32>
    %113 = arith.truncf %109 : vector<8x128xf32> to vector<8x128xbf16>
    %c0_41 = arith.constant 0 : index
    %c0_42 = arith.constant 0 : index
    %114 = vector.load %arg3[%c0_41, %c0_42] : memref<128x512xbf16, #tpu.memory_space<vmem>>, vector<128x512xbf16>
    %cst_43 = arith.constant dense<0.000000e+00> : vector<8x512xf32>
    %115 = tpu.matmul %113, %114, %cst_43 {dimension_numbers = #tpu.dot_dimension_numbers<[1], [0], [0], [1], [0, 0, 1, 1], [], []>} : vector<8x128xbf16>, vector<128x512xbf16>, vector<8x512xf32> -> vector<8x512xf32>
    %116 = arith.addf %112, %115 : vector<8x512xf32>
    %117 = vector.extract_strided_slice %116 {offsets = [0, 0], sizes = [8, 128], strides = [1, 1]} : vector<8x512xf32> to vector<8x128xf32>
    %118 = arith.negf %117 : vector<8x128xf32>
    %119 = math.exp %118 : vector<8x128xf32>
    %cst_44 = arith.constant 1.000000e+00 : f32
    %120 = vector.broadcast %cst_44 : f32 to vector<8x128xf32>
    %121 = arith.addf %120, %119 : vector<8x128xf32>
    %122 = arith.divf %120, %121 : vector<8x128xf32>
    %123 = vector.extract_strided_slice %116 {offsets = [0, 128], sizes = [8, 128], strides = [1, 1]} : vector<8x512xf32> to vector<8x128xf32>
    %124 = arith.negf %123 : vector<8x128xf32>
    %125 = math.exp %124 : vector<8x128xf32>
    %cst_45 = arith.constant 1.000000e+00 : f32
    %126 = vector.broadcast %cst_45 : f32 to vector<8x128xf32>
    %127 = arith.addf %126, %125 : vector<8x128xf32>
    %128 = arith.divf %126, %127 : vector<8x128xf32>
    %129 = vector.extract_strided_slice %116 {offsets = [0, 256], sizes = [8, 128], strides = [1, 1]} : vector<8x512xf32> to vector<8x128xf32>
    %130 = math.tanh %129 : vector<8x128xf32>
    %131 = vector.extract_strided_slice %116 {offsets = [0, 384], sizes = [8, 128], strides = [1, 1]} : vector<8x512xf32> to vector<8x128xf32>
    %132 = arith.negf %131 : vector<8x128xf32>
    %133 = math.exp %132 : vector<8x128xf32>
    %cst_46 = arith.constant 1.000000e+00 : f32
    %134 = vector.broadcast %cst_46 : f32 to vector<8x128xf32>
    %135 = arith.addf %134, %133 : vector<8x128xf32>
    %136 = arith.divf %134, %135 : vector<8x128xf32>
    %137 = arith.mulf %128, %107 : vector<8x128xf32>
    %138 = arith.mulf %122, %130 : vector<8x128xf32>
    %139 = arith.addf %137, %138 : vector<8x128xf32>
    %140 = math.tanh %139 : vector<8x128xf32>
    %141 = arith.mulf %136, %140 : vector<8x128xf32>
    %c4_i32 = arith.constant 4 : i32
    %c0_47 = arith.constant 0 : index
    %c0_48 = arith.constant 0 : index
    %142 = vector.load %arg7[%c0_47, %c0_48] : memref<8x128xf32, #tpu.memory_space<vmem>>, vector<8x128xf32>
    tpu.vector_store %arg7[%c0_47, %c0_48], %141 {strides = array<i32>} : memref<8x128xf32, #tpu.memory_space<vmem>>, vector<8x128xf32>,
    %c0_49 = arith.constant 0 : index
    %c0_50 = arith.constant 0 : index
    %143 = vector.load %arg8[%c0_49, %c0_50] : memref<8x128xf32, #tpu.memory_space<vmem>>, vector<8x128xf32>
    tpu.vector_store %arg8[%c0_49, %c0_50], %139 {strides = array<i32>} : memref<8x128xf32, #tpu.memory_space<vmem>>, vector<8x128xf32>,
    %c0_i32_51 = arith.constant 0 : i32
    %144 = arith.cmpi eq, %arg0, %c0_i32_51 : i32
    %145 = arith.extui %144 : i1 to i32
    %c0_i32_52 = arith.constant 0 : i32
    %146 = arith.cmpi ne, %145, %c0_i32_52 : i32
    scf.if %146 {
      %c0_53 = arith.constant 0 : index
      %c0_54 = arith.constant 0 : index
      %147 = vector.load %arg5[%c0_53, %c0_54] : memref<8x128xf32, #tpu.memory_space<vmem>>, vector<8x128xf32>
      tpu.vector_store %arg5[%c0_53, %c0_54], %141 {strides = array<i32>} : memref<8x128xf32, #tpu.memory_space<vmem>>, vector<8x128xf32>,
    } else {
    }
    return
  }
  func.func @transform_0(%arg0: i32) -> (i32, i32, i32) {
    %c0_i32 = arith.constant 0 : i32
    %c0_i32_0 = arith.constant 0 : i32
    %c0_i32_1 = arith.constant 0 : i32
    return %arg0, %c0_i32, %c0_i32_0 : i32, i32, i32
  }
  func.func @transform_1(%arg0: i32) -> (i32, i32) {
    %c0_i32 = arith.constant 0 : i32
    %c0_i32_0 = arith.constant 0 : i32
    %c0_i32_1 = arith.constant 0 : i32
    return %c0_i32, %c0_i32_0 : i32, i32
  }
  func.func @transform_2(%arg0: i32) -> (i32, i32) {
    %c0_i32 = arith.constant 0 : i32
    %c0_i32_0 = arith.constant 0 : i32
    %c0_i32_1 = arith.constant 0 : i32
    return %c0_i32, %c0_i32_0 : i32, i32
  }
  func.func @transform_3(%arg0: i32) -> (i32, i32) {
    %c0_i32 = arith.constant 0 : i32
    %c0_i32_0 = arith.constant 0 : i32
    %c0_i32_1 = arith.constant 0 : i32
    return %c0_i32, %c0_i32_0 : i32, i32
  }
  func.func @transform_4(%arg0: i32) -> (i32, i32) {
    %c0_i32 = arith.constant 0 : i32
    %c0_i32_0 = arith.constant 0 : i32
    %c0_i32_1 = arith.constant 0 : i32
    return %c0_i32, %c0_i32_0 : i32, i32
  }
}

</mosaic_0001>

<llo_original>
// kernel: tpu_custom_call.1
$region0: #{tpu_custom_call.1}
  #allocation0 [shape = 'u32[]', space=smem, size = 0x4, offset = 0x4, fixed_abs, tag = 'smem constant byte address 0x4 - core index']
  #allocation1 [shape = 'u32[144,128]{1,0:T(1,128)}', space=vmem, size = 0x12000, scoped, tag = 'internal scratch']
  #allocation2 [shape = 'f32[4,8,512]{2,1,0:T(8,128)}', space=vmem, size = 0x10000, scoped, tag = 'scratch operand']
  #allocation3 [shape = 'f32[8,128]{1,0:T(8,128)}', space=vmem, size = 0x1000, scoped, tag = 'scratch operand']
  #allocation4 [shape = 'f32[8,128]{1,0:T(8,128)}', space=vmem, size = 0x1000, scoped, tag = 'scratch operand']
  %s0 = inlined_call_operand.hbm [shape: bf16[4,8,32], index: 0, kind: input, shape index: {}]
  %s1 = inlined_call_operand.hbm [shape: bf16[32,512], index: 1, kind: input, shape index: {}]
  %s2 = inlined_call_operand.hbm [shape: bf16[128,512], index: 2, kind: input, shape index: {}]
  %s3 = inlined_call_operand.vmem [shape: f32[1,512], index: 3, kind: input, shape index: {}]
  %s4 = inlined_call_operand.hbm [shape: f32[8,128], index: 4, kind: output, shape index: {}]
  %s5 = sld [smem:[#allocation0]]
  $region46: #{tpu_custom_call.1} parent=0
    _
  %s7 = ssub.s32 1, %s5
  %s8 = scalar_select 0, %s7, %s5
  $region1: #{tpu_custom_call.1} parent=0
    #allocation5 [shape = 'u8[8192]{0}', space=vmem, size = 0x2000, scoped, tag = 'input window, operand 0, single buffered']
    #allocation6 [shape = 's32[1]{0}', space=sflag, size = 0x4, scoped, tag = 'scoped memory for tpu_custom_call.1']
    #allocation7 [shape = 's32[1]{0}', space=sflag, size = 0x4, scoped, tag = 'scoped memory for tpu_custom_call.1']
    #allocation8 [shape = 'u8[32768]{0}', space=vmem, size = 0x8000, scoped, tag = 'input window, operand 1, single buffered']
    #allocation9 [shape = 's32[1]{0}', space=sflag, size = 0x4, scoped, tag = 'scoped memory for tpu_custom_call.1']
    #allocation10 [shape = 'u8[131072]{0}', space=vmem, size = 0x20000, scoped, tag = 'input window, operand 2, single buffered']
    #allocation11 [shape = 'u8[4096]{0}', space=vmem, size = 0x1000, scoped, tag = 'output window, operand 0, single buffered']
    %9 = vsyncpa [#allocation6], 0
    %10 = vsyncpa [#allocation9], 0
    %11 = vsyncpa [#allocation7], 0
    // Predicated region
    $region2: #{tpu_custom_call.1} parent=1 // pred_check
      _
    $region3: #{tpu_custom_call.1} parent=1 // pred_check_branch
      %13 = sbr.rel (0) target = $region5
    $region4: #{tpu_custom_call.1} parent=1 // pred_region
      %s15 = ssub.s32 256, 256
      %16 = vsyncadd [#allocation6], %s15
      %s17 = sshll.u32 [#allocation5], 4
      %s18 = int_to_ptr.vmem [resolvable:$true] %s17
      %23 = dma.hbm_to_vmem [thread:$0]  %s0, 256, %s18, [#allocation6], 64, 64, 4
    $region5: #{tpu_custom_call.1} parent=1 // pred_fallthru
      _
    // Predicated region
    $region6: #{tpu_custom_call.1} parent=1 // pred_check
      _
    $region7: #{tpu_custom_call.1} parent=1 // pred_check_branch
      %25 = sbr.rel (0) target = $region9
    $region8: #{tpu_custom_call.1} parent=1 // pred_region
      %s27 = ssub.s32 1024, 1024
      %28 = vsyncadd [#allocation9], %s27
      %s29 = sshll.u32 [#allocation8], 4
      %s30 = int_to_ptr.vmem [resolvable:$true] %s29
      %35 = dma.hbm_to_vmem [thread:$0]  %s1, 1024, %s30, [#allocation9], 256, 256, 16
    $region9: #{tpu_custom_call.1} parent=1 // pred_fallthru
      _
    // Predicated region
    $region10: #{tpu_custom_call.1} parent=1 // pred_check
      _
    $region11: #{tpu_custom_call.1} parent=1 // pred_check_branch
      %37 = sbr.rel (0) target = $region13
    $region12: #{tpu_custom_call.1} parent=1 // pred_region
      %s39 = ssub.s32 4096, 4096
      %40 = vsyncadd [#allocation9], %s39
      %s41 = sshll.u32 [#allocation10], 4
      %s42 = int_to_ptr.vmem [resolvable:$true] %s41
      %47 = dma.hbm_to_vmem [thread:$0]  %s2, 4096, %s42, [#allocation9], 256, 256, 16
    $region13: #{tpu_custom_call.1} parent=1 // pred_fallthru
      _
    // Predicated region
    $region14: #{tpu_custom_call.1} parent=1 // pred_check
      _
    $region15: #{tpu_custom_call.1} parent=1 // pred_check_branch
      %49 = sbr.rel (0) target = $region17
    $region16: #{tpu_custom_call.1} parent=1 // pred_region
      _
    $region17: #{tpu_custom_call.1} parent=1 // pred_fallthru
      _
    // Predicated region
    $region18: #{tpu_custom_call.1} parent=1 // pred_check
      _
    $region19: #{tpu_custom_call.1} parent=1 // pred_check_branch
      %51 = sbr.rel (0) target = $region21
    $region20: #{tpu_custom_call.1} parent=1 // pred_region
      %52 = dma.done [#allocation6], 256
    $region21: #{tpu_custom_call.1} parent=1 // pred_fallthru
      _
    // Predicated region
    $region22: #{tpu_custom_call.1} parent=1 // pred_check
      _
    $region23: #{tpu_custom_call.1} parent=1 // pred_check_branch
      %54 = sbr.rel (0) target = $region25
    $region24: #{tpu_custom_call.1} parent=1 // pred_region
      %55 = dma.done [#allocation9], 1024
    $region25: #{tpu_custom_call.1} parent=1 // pred_fallthru
      _
    // Predicated region
    $region26: #{tpu_custom_call.1} parent=1 // pred_check
      _
    $region27: #{tpu_custom_call.1} parent=1 // pred_check_branch
      %57 = sbr.rel (0) target = $region29
    $region28: #{tpu_custom_call.1} parent=1 // pred_region
      %58 = dma.done [#allocation9], 4096
    $region29: #{tpu_custom_call.1} parent=1 // pred_fallthru
      _
    %p60 = scmp.eq.s32.totalorder 0, 0
    // Predicated region
    $region30: #{tpu_custom_call.1} parent=1 // pred_check
      %p61 = pneg %p60
    $region31: #{tpu_custom_call.1} parent=1 // pred_check_branch
      %63 = sbr.rel (%p61) target = $region33
    $region32: #{tpu_custom_call.1} parent=1 // pred_region
      %64 = vst [vmem:[#allocation3] sm:$0xff] 0.0
      %65 = vst [vmem:[#allocation4] sm:$0xff] 0.0
    $region33: #{tpu_custom_call.1} parent=1 // pred_fallthru
      _
    %v66 = vld [vmem:[#allocation5] sm:$0xf]
    %v67 = vld [vmem:[#allocation5 + $0x4] sm:$0xf]
    %v68 = vld [vmem:[#allocation5 + $0x8] sm:$0xf]
    %v69 = vld [vmem:[#allocation5 + $0xc] sm:$0xf]
    %v70 = vld [vmem:[#allocation8] sm:$0xff]
    %v71 = vld [vmem:[#allocation8 + $0x8] sm:$0xff]
    %v72 = vld [vmem:[#allocation8 + $0x10] sm:$0xff]
    %v73 = vld [vmem:[#allocation8 + $0x18] sm:$0xff]
    %v74 = vld [vmem:[#allocation8 + $0x20] sm:$0xff]
    %v75 = vld [vmem:[#allocation8 + $0x28] sm:$0xff]
    %v76 = vld [vmem:[#allocation8 + $0x30] sm:$0xff]
    %v77 = vld [vmem:[#allocation8 + $0x38] sm:$0xff]
    %v78 = vld [vmem:[%s3] sm:$0xf]
    %v80 = vlaneseq
    %v81 = vshrl.u32 %v80, 7
    %v82 = vsub.s32 0, %v81
    %v83 = vrot.slane %v78, %v82
    %v84 = vlaneseq
    %v85 = vshrl.u32 %v84, 7
    %v86 = vsub.s32 1, %v85
    %v87 = vrot.slane %v78, %v86
    %v88 = vlaneseq
    %v89 = vshrl.u32 %v88, 7
    %v90 = vsub.s32 2, %v89
    %v91 = vrot.slane %v78, %v90
    %v92 = vlaneseq
    %v93 = vshrl.u32 %v92, 7
    %v94 = vsub.s32 3, %v93
    %v95 = vrot.slane %v78, %v94
    %v104 = vunpack.c.l.b16 %v66
    %v105 = vunpack.c.l.b16 %v67
    %v106 = vunpack.c.l.b16 %v68
    %v107 = vunpack.c.l.b16 %v69
    %v108 = vpack.c.b16 %v105, %v104
    %v109 = vpack.c.b16 %v107, %v106
    %v118 = vunpack.c.l.b16 %v70
    %v119 = vunpack.c.h.b16 %v70
    %v120 = vunpack.c.l.b16 %v71
    %v121 = vunpack.c.h.b16 %v71
    %v122 = vunpack.c.l.b16 %v72
    %v123 = vunpack.c.h.b16 %v72
    %v124 = vunpack.c.l.b16 %v73
    %v125 = vunpack.c.h.b16 %v73
    %v126 = vunpack.c.l.b16 %v74
    %v127 = vunpack.c.h.b16 %v74
    %v128 = vunpack.c.l.b16 %v75
    %v129 = vunpack.c.h.b16 %v75
    %v130 = vunpack.c.l.b16 %v76
    %v131 = vunpack.c.h.b16 %v76
    %v132 = vunpack.c.l.b16 %v77
    %v133 = vunpack.c.h.b16 %v77
    %v134 = vpack.c.b16 %v122, %v118
    %v135 = vpack.c.b16 %v123, %v119
    %v136 = vpack.c.b16 %v124, %v120
    %v137 = vpack.c.b16 %v125, %v121
    %v138 = vpack.c.b16 %v130, %v126
    %v139 = vpack.c.b16 %v131, %v127
    %v140 = vpack.c.b16 %v132, %v128
    %v141 = vpack.c.b16 %v133, %v129
    %vm150 = vcmask 261120
    %v152 = vsel %vm150, %v108, 0
    %v155 = vsel %vm150, %v109, 0
    %157 = vmatprep.subr.bf16.mxu0 %v135
    %158 = vmatpush1.bf16.msra.mxu0 %v134
    %159 = vmatprep.subr.bf16.mxu0 %v139
    %160 = vmatpush1.bf16.msra.mxu0 %v138
    %161 = vmatprep.subr.bf16.mxu0 0
    %162 = vmatpush1.bf16.msra.mxu0 0
    %163 = vmatprep.subr.bf16.mxu0 0
    %164 = vmatpush1.bf16.msra.mxu0 0
    %165 = vmatprep.subr.bf16.mxu0 0
    %166 = vmatpush1.bf16.msra.mxu0 0
    %167 = vmatprep.subr.bf16.mxu0 0
    %168 = vmatpush1.bf16.msra.mxu0 0
    %169 = vmatprep.subr.bf16.mxu0 0
    %170 = vmatpush1.bf16.msra.mxu0 0
    %171 = vmatprep.subr.bf16.mxu0 0
    %172 = vmatpush1.bf16.msra.mxu0 0
    %173 = vmatprep.subr.bf16.mxu0 0
    %174 = vmatpush1.bf16.msra.mxu0 0
    %175 = vmatprep.subr.bf16.mxu0 0
    %176 = vmatpush1.bf16.msra.mxu0 0
    %177 = vmatprep.subr.bf16.mxu0 0
    %178 = vmatpush1.bf16.msra.mxu0 0
    %179 = vmatprep.subr.bf16.mxu0 0
    %180 = vmatpush1.bf16.msra.mxu0 0
    %181 = vmatprep.subr.bf16.mxu0 0
    %182 = vmatpush1.bf16.msra.mxu0 0
    %183 = vmatprep.subr.bf16.mxu0 0
    %184 = vmatpush1.bf16.msra.mxu0 0
    %185 = vmatprep.subr.bf16.mxu0 0
    %186 = vmatpush1.bf16.msra.mxu0 0
    %187 = vmatprep.subr.bf16.mxu0 0
    %188 = vmatpush1.bf16.msra.mxu0 0
    %189 = vmatprep.mubr.bf16.mxu0 0
    %190 = vmatmul.mubr.bf16.gmra.mrb[0].mxu0 %v152
    %v191 = vpop.f32.mrb[0].mxu0
    %v192 = vadd.f32 %v83, %v191
    %v193 = vpop.f32.mrb[0].mxu0
    %v194 = vadd.f32 %v87, %v193
    %v195 = vpop.f32.mrb[0].mxu0
    %v196 = vadd.f32 %v83, %v195
    %v197 = vpop.f32.mrb[0].mxu0
    %v198 = vadd.f32 %v87, %v197
    %199 = vmatprep.mubr.bf16.mxu0 0
    %200 = vmatmul.mubr.bf16.gmra.mrb[0].mxu0 %v155
    %v201 = vpop.f32.mrb[0].mxu0
    %v202 = vadd.f32 %v83, %v201
    %v203 = vpop.f32.mrb[0].mxu0
    %v204 = vadd.f32 %v87, %v203
    %v205 = vpop.f32.mrb[0].mxu0
    %v206 = vadd.f32 %v83, %v205
    %v207 = vpop.f32.mrb[0].mxu0
    %v208 = vadd.f32 %v87, %v207
    %209 = vdwg.mxu0
    %210 = vmatprep.subr.bf16.mxu0 %v137
    %211 = vmatpush1.bf16.msra.mxu0 %v136
    %212 = vmatprep.subr.bf16.mxu0 %v141
    %213 = vmatpush1.bf16.msra.mxu0 %v140
    %214 = vmatprep.subr.bf16.mxu0 0
    %215 = vmatpush1.bf16.msra.mxu0 0
    %216 = vmatprep.subr.bf16.mxu0 0
    %217 = vmatpush1.bf16.msra.mxu0 0
    %218 = vmatprep.subr.bf16.mxu0 0
    %219 = vmatpush1.bf16.msra.mxu0 0
    %220 = vmatprep.subr.bf16.mxu0 0
    %221 = vmatpush1.bf16.msra.mxu0 0
    %222 = vmatprep.subr.bf16.mxu0 0
    %223 = vmatpush1.bf16.msra.mxu0 0
    %224 = vmatprep.subr.bf16.mxu0 0
    %225 = vmatpush1.bf16.msra.mxu0 0
    %226 = vmatprep.subr.bf16.mxu0 0
    %227 = vmatpush1.bf16.msra.mxu0 0
    %228 = vmatprep.subr.bf16.mxu0 0
    %229 = vmatpush1.bf16.msra.mxu0 0
    %230 = vmatprep.subr.bf16.mxu0 0
    %231 = vmatpush1.bf16.msra.mxu0 0
    %232 = vmatprep.subr.bf16.mxu0 0
    %233 = vmatpush1.bf16.msra.mxu0 0
    %234 = vmatprep.subr.bf16.mxu0 0
    %235 = vmatpush1.bf16.msra.mxu0 0
    %236 = vmatprep.subr.bf16.mxu0 0
    %237 = vmatpush1.bf16.msra.mxu0 0
    %238 = vmatprep.subr.bf16.mxu0 0
    %239 = vmatpush1.bf16.msra.mxu0 0
    %240 = vmatprep.subr.bf16.mxu0 0
    %241 = vmatpush1.bf16.msra.mxu0 0
    %242 = vmatprep.mubr.bf16.mxu0 0
    %243 = vmatmul.mubr.bf16.gmra.mrb[0].mxu0 %v152
    %v244 = vpop.f32.mrb[0].mxu0
    %v245 = vadd.f32 %v91, %v244
    %v246 = vpop.f32.mrb[0].mxu0
    %v247 = vadd.f32 %v95, %v246
    %v248 = vpop.f32.mrb[0].mxu0
    %v249 = vadd.f32 %v91, %v248
    %v250 = vpop.f32.mrb[0].mxu0
    %v251 = vadd.f32 %v95, %v250
    %252 = vmatprep.mubr.bf16.mxu0 0
    %253 = vmatmul.mubr.bf16.gmra.mrb[0].mxu0 %v155
    %v254 = vpop.f32.mrb[0].mxu0
    %v255 = vadd.f32 %v91, %v254
    %v256 = vpop.f32.mrb[0].mxu0
    %v257 = vadd.f32 %v95, %v256
    %v258 = vpop.f32.mrb[0].mxu0
    %v259 = vadd.f32 %v91, %v258
    %v260 = vpop.f32.mrb[0].mxu0
    %v261 = vadd.f32 %v95, %v260
    %262 = vdwg.mxu0
    %263 = vst [vmem:[#allocation2] sm:$0xff] %v192
    %264 = vst [vmem:[#allocation2 + $0x8] sm:$0xff] %v194
    %265 = vst [vmem:[#allocation2 + $0x10] sm:$0xff] %v245
    %266 = vst [vmem:[#allocation2 + $0x18] sm:$0xff] %v247
    %267 = vst [vmem:[#allocation2 + $0x20] sm:$0xff] %v196
    %268 = vst [vmem:[#allocation2 + $0x28] sm:$0xff] %v198
    %269 = vst [vmem:[#allocation2 + $0x30] sm:$0xff] %v249
    %270 = vst [vmem:[#allocation2 + $0x38] sm:$0xff] %v251
    %271 = vst [vmem:[#allocation2 + $0x40] sm:$0xff] %v202
    %272 = vst [vmem:[#allocation2 + $0x48] sm:$0xff] %v204
    %273 = vst [vmem:[#allocation2 + $0x50] sm:$0xff] %v255
    %274 = vst [vmem:[#allocation2 + $0x58] sm:$0xff] %v257
    %275 = vst [vmem:[#allocation2 + $0x60] sm:$0xff] %v206
    %276 = vst [vmem:[#allocation2 + $0x68] sm:$0xff] %v208
    %277 = vst [vmem:[#allocation2 + $0x70] sm:$0xff] %v259
    %278 = vst [vmem:[#allocation2 + $0x78] sm:$0xff] %v261
    %v279 = vld [vmem:[#allocation3] sm:$0xff]
    %v280 = vld [vmem:[#allocation4] sm:$0xff]
    %v281 = vld [vmem:[#allocation2] sm:$0xff]
    %v282 = vld [vmem:[#allocation2 + $0x8] sm:$0xff]
    %v283 = vld [vmem:[#allocation2 + $0x10] sm:$0xff]
    %v284 = vld [vmem:[#allocation2 + $0x18] sm:$0xff]
    %v285 = vpack.c.bf16 %v279, %v279
    %v286 = vld [vmem:[#allocation10] sm:$0xff]
    %v287 = vld [vmem:[#allocation10 + $0x8] sm:$0xff]
    %v288 = vld [vmem:[#allocation10 + $0x10] sm:$0xff]
    %v289 = vld [vmem:[#allocation10 + $0x18] sm:$0xff]
    %v290 = vld [vmem:[#allocation10 + $0x20] sm:$0xff]
    %v291 = vld [vmem:[#allocation10 + $0x28] sm:$0xff]
    %v292 = vld [vmem:[#allocation10 + $0x30] sm:$0xff]
    %v293 = vld [vmem:[#allocation10 + $0x38] sm:$0xff]
    %v294 = vld [vmem:[#allocation10 + $0x40] sm:$0xff]
    %v295 = vld [vmem:[#allocation10 + $0x48] sm:$0xff]
    %v296 = vld [vmem:[#allocation10 + $0x50] sm:$0xff]
    %v297 = vld [vmem:[#allocation10 + $0x58] sm:$0xff]
    %v298 = vld [vmem:[#allocation10 + $0x60] sm:$0xff]
    %v299 = vld [vmem:[#allocation10 + $0x68] sm:$0xff]
    %v300 = vld [vmem:[#allocation10 + $0x70] sm:$0xff]
    %v301 = vld [vmem:[#allocation10 + $0x78] sm:$0xff]
    %v302 = vld [vmem:[#allocation10 + $0x80] sm:$0xff]
    %v303 = vld [vmem:[#allocation10 + $0x88] sm:$0xff]
    %v304 = vld [vmem:[#allocation10 + $0x90] sm:$0xff]
    %v305 = vld [vmem:[#allocation10 + $0x98] sm:$0xff]
    %v306 = vld [vmem:[#allocation10 + $0xa0] sm:$0xff]
    %v307 = vld [vmem:[#allocation10 + $0xa8] sm:$0xff]
    %v308 = vld [vmem:[#allocation10 + $0xb0] sm:$0xff]
    %v309 = vld [vmem:[#allocation10 + $0xb8] sm:$0xff]
    %v310 = vld [vmem:[#allocation10 + $0xc0] sm:$0xff]
    %v311 = vld [vmem:[#allocation10 + $0xc8] sm:$0xff]
    %v312 = vld [vmem:[#allocation10 + $0xd0] sm:$0xff]
    %v313 = vld [vmem:[#allocation10 + $0xd8] sm:$0xff]
    %v314 = vld [vmem:[#allocation10 + $0xe0] sm:$0xff]
    %v315 = vld [vmem:[#allocation10 + $0xe8] sm:$0xff]
    %v316 = vld [vmem:[#allocation10 + $0xf0] sm:$0xff]
    %v317 = vld [vmem:[#allocation10 + $0xf8] sm:$0xff]
    %v350 = vunpack.c.l.b16 %v286
    %v351 = vunpack.c.h.b16 %v286
    %v352 = vunpack.c.l.b16 %v287
    %v353 = vunpack.c.h.b16 %v287
    %v354 = vunpack.c.l.b16 %v288
    %v355 = vunpack.c.h.b16 %v288
    %v356 = vunpack.c.l.b16 %v289
    %v357 = vunpack.c.h.b16 %v289
    %v358 = vunpack.c.l.b16 %v290
    %v359 = vunpack.c.h.b16 %v290
    %v360 = vunpack.c.l.b16 %v291
    %v361 = vunpack.c.h.b16 %v291
    %v362 = vunpack.c.l.b16 %v292
    %v363 = vunpack.c.h.b16 %v292
    %v364 = vunpack.c.l.b16 %v293
    %v365 = vunpack.c.h.b16 %v293
    %v366 = vunpack.c.l.b16 %v294
    %v367 = vunpack.c.h.b16 %v294
    %v368 = vunpack.c.l.b16 %v295
    %v369 = vunpack.c.h.b16 %v295
    %v370 = vunpack.c.l.b16 %v296
    %v371 = vunpack.c.h.b16 %v296
    %v372 = vunpack.c.l.b16 %v297
    %v373 = vunpack.c.h.b16 %v297
    %v374 = vunpack.c.l.b16 %v298
    %v375 = vunpack.c.h.b16 %v298
    %v376 = vunpack.c.l.b16 %v299
    %v377 = vunpack.c.h.b16 %v299
    %v378 = vunpack.c.l.b16 %v300
    %v379 = vunpack.c.h.b16 %v300
    %v380 = vunpack.c.l.b16 %v301
    %v381 = vunpack.c.h.b16 %v301
    %v382 = vunpack.c.l.b16 %v302
    %v383 = vunpack.c.h.b16 %v302
    %v384 = vunpack.c.l.b16 %v303
    %v385 = vunpack.c.h.b16 %v303
    %v386 = vunpack.c.l.b16 %v304
    %v387 = vunpack.c.h.b16 %v304
    %v388 = vunpack.c.l.b16 %v305
    %v389 = vunpack.c.h.b16 %v305
    %v390 = vunpack.c.l.b16 %v306
    %v391 = vunpack.c.h.b16 %v306
    %v392 = vunpack.c.l.b16 %v307
    %v393 = vunpack.c.h.b16 %v307
    %v394 = vunpack.c.l.b16 %v308
    %v395 = vunpack.c.h.b16 %v308
    %v396 = vunpack.c.l.b16 %v309
    %v397 = vunpack.c.h.b16 %v309
    %v398 = vunpack.c.l.b16 %v310
    %v399 = vunpack.c.h.b16 %v310
    %v400 = vunpack.c.l.b16 %v311
    %v401 = vunpack.c.h.b16 %v311
    %v402 = vunpack.c.l.b16 %v312
    %v403 = vunpack.c.h.b16 %v312
    %v404 = vunpack.c.l.b16 %v313
    %v405 = vunpack.c.h.b16 %v313
    %v406 = vunpack.c.l.b16 %v314
    %v407 = vunpack.c.h.b16 %v314
    %v408 = vunpack.c.l.b16 %v315
    %v409 = vunpack.c.h.b16 %v315
    %v410 = vunpack.c.l.b16 %v316
    %v411 = vunpack.c.h.b16 %v316
    %v412 = vunpack.c.l.b16 %v317
    %v413 = vunpack.c.h.b16 %v317
    %v414 = vpack.c.b16 %v354, %v350
    %v415 = vpack.c.b16 %v355, %v351
    %v416 = vpack.c.b16 %v356, %v352
    %v417 = vpack.c.b16 %v357, %v353
    %v418 = vpack.c.b16 %v362, %v358
    %v419 = vpack.c.b16 %v363, %v359
    %v420 = vpack.c.b16 %v364, %v360
    %v421 = vpack.c.b16 %v365, %v361
    %v422 = vpack.c.b16 %v370, %v366
    %v423 = vpack.c.b16 %v371, %v367
    %v424 = vpack.c.b16 %v372, %v368
    %v425 = vpack.c.b16 %v373, %v369
    %v426 = vpack.c.b16 %v378, %v374
    %v427 = vpack.c.b16 %v379, %v375
    %v428 = vpack.c.b16 %v380, %v376
    %v429 = vpack.c.b16 %v381, %v377
    %v430 = vpack.c.b16 %v386, %v382
    %v431 = vpack.c.b16 %v387, %v383
    %v432 = vpack.c.b16 %v388, %v384
    %v433 = vpack.c.b16 %v389, %v385
    %v434 = vpack.c.b16 %v394, %v390
    %v435 = vpack.c.b16 %v395, %v391
    %v436 = vpack.c.b16 %v396, %v392
    %v437 = vpack.c.b16 %v397, %v393
    %v438 = vpack.c.b16 %v402, %v398
    %v439 = vpack.c.b16 %v403, %v399
    %v440 = vpack.c.b16 %v404, %v400
    %v441 = vpack.c.b16 %v405, %v401
    %v442 = vpack.c.b16 %v410, %v406
    %v443 = vpack.c.b16 %v411, %v407
    %v444 = vpack.c.b16 %v412, %v408
    %v445 = vpack.c.b16 %v413, %v409
    %478 = vmatprep.subr.bf16.mxu0 %v415
    %479 = vmatpush1.bf16.msra.mxu0 %v414
    %480 = vmatprep.subr.bf16.mxu0 %v419
    %481 = vmatpush1.bf16.msra.mxu0 %v418
    %482 = vmatprep.subr.bf16.mxu0 %v423
    %483 = vmatpush1.bf16.msra.mxu0 %v422
    %484 = vmatprep.subr.bf16.mxu0 %v427
    %485 = vmatpush1.bf16.msra.mxu0 %v426
    %486 = vmatprep.subr.bf16.mxu0 %v431
    %487 = vmatpush1.bf16.msra.mxu0 %v430
    %488 = vmatprep.subr.bf16.mxu0 %v435
    %489 = vmatpush1.bf16.msra.mxu0 %v434
    %490 = vmatprep.subr.bf16.mxu0 %v439
    %491 = vmatpush1.bf16.msra.mxu0 %v438
    %492 = vmatprep.subr.bf16.mxu0 %v443
    %493 = vmatpush1.bf16.msra.mxu0 %v442
    %494 = vmatprep.subr.bf16.mxu0 0
    %495 = vmatpush1.bf16.msra.mxu0 0
    %496 = vmatprep.subr.bf16.mxu0 0
    %497 = vmatpush1.bf16.msra.mxu0 0
    %498 = vmatprep.subr.bf16.mxu0 0
    %499 = vmatpush1.bf16.msra.mxu0 0
    %500 = vmatprep.subr.bf16.mxu0 0
    %501 = vmatpush1.bf16.msra.mxu0 0
    %502 = vmatprep.subr.bf16.mxu0 0
    %503 = vmatpush1.bf16.msra.mxu0 0
    %504 = vmatprep.subr.bf16.mxu0 0
    %505 = vmatpush1.bf16.msra.mxu0 0
    %506 = vmatprep.subr.bf16.mxu0 0
    %507 = vmatpush1.bf16.msra.mxu0 0
    %508 = vmatprep.subr.bf16.mxu0 0
    %509 = vmatpush1.bf16.msra.mxu0 0
    %510 = vmatprep.mubr.bf16.mxu0 0
    %511 = vmatmul.mubr.bf16.gmra.mrb[0].mxu0 %v285
    %v512 = vpop.f32.mrb[0].mxu0
    %v513 = vadd.f32 0.0, %v512
    %v514 = vpop.f32.mrb[0].mxu0
    %v515 = vadd.f32 0.0, %v514
    %v516 = vpop.f32.mrb[0].mxu0
    %v517 = vpop.f32.mrb[0].mxu0
    %518 = vdwg.mxu0
    %519 = vmatprep.subr.bf16.mxu0 %v417
    %520 = vmatpush1.bf16.msra.mxu0 %v416
    %521 = vmatprep.subr.bf16.mxu0 %v421
    %522 = vmatpush1.bf16.msra.mxu0 %v420
    %523 = vmatprep.subr.bf16.mxu0 %v425
    %524 = vmatpush1.bf16.msra.mxu0 %v424
    %525 = vmatprep.subr.bf16.mxu0 %v429
    %526 = vmatpush1.bf16.msra.mxu0 %v428
    %527 = vmatprep.subr.bf16.mxu0 %v433
    %528 = vmatpush1.bf16.msra.mxu0 %v432
    %529 = vmatprep.subr.bf16.mxu0 %v437
    %530 = vmatpush1.bf16.msra.mxu0 %v436
    %531 = vmatprep.subr.bf16.mxu0 %v441
    %532 = vmatpush1.bf16.msra.mxu0 %v440
    %533 = vmatprep.subr.bf16.mxu0 %v445
    %534 = vmatpush1.bf16.msra.mxu0 %v444
    %535 = vmatprep.subr.bf16.mxu0 0
    %536 = vmatpush1.bf16.msra.mxu0 0
    %537 = vmatprep.subr.bf16.mxu0 0
    %538 = vmatpush1.bf16.msra.mxu0 0
    %539 = vmatprep.subr.bf16.mxu0 0
    %540 = vmatpush1.bf16.msra.mxu0 0
    %541 = vmatprep.subr.bf16.mxu0 0
    %542 = vmatpush1.bf16.msra.mxu0 0
    %543 = vmatprep.subr.bf16.mxu0 0
    %544 = vmatpush1.bf16.msra.mxu0 0
    %545 = vmatprep.subr.bf16.mxu0 0
    %546 = vmatpush1.bf16.msra.mxu0 0
    %547 = vmatprep.subr.bf16.mxu0 0
    %548 = vmatpush1.bf16.msra.mxu0 0
    %549 = vmatprep.subr.bf16.mxu0 0
    %550 = vmatpush1.bf16.msra.mxu0 0
    %551 = vmatprep.mubr.bf16.mxu0 0
    %552 = vmatmul.mubr.bf16.gmra.mrb[0].mxu0 %v285
    %v553 = vpop.f32.mrb[0].mxu0
    %v554 = vadd.f32 0.0, %v553
    %v555 = vpop.f32.mrb[0].mxu0
    %v556 = vadd.f32 0.0, %v555
    %v557 = vpop.f32.mrb[0].mxu0
    %v558 = vpop.f32.mrb[0].mxu0
    %559 = vdwg.mxu0
    %v560 = vadd.f32 %v281, %v513
    %v561 = vadd.f32 %v282, %v515
    %v562 = vadd.f32 %v283, %v554
    %v563 = vadd.f32 %v284, %v556
    %v564 = vxor.u32 %v560, 2147483648
    %v565 = vmul.f32 %v564, 1.442695
    %v566 = vpow.pop %v565
    %v567 = vadd.f32 %v566, 1.0
    %v568 = vrcp.pop %v567
    %v569 = vmul.f32 1.0, %v568
    %v570 = vxor.u32 %v561, 2147483648
    %v571 = vmul.f32 %v570, 1.442695
    %v572 = vpow.pop %v571
    %v573 = vadd.f32 %v572, 1.0
    %v574 = vrcp.pop %v573
    %v575 = vmul.f32 1.0, %v574
    %v576 = vtanh.pop %v562
    %v577 = vxor.u32 %v563, 2147483648
    %v578 = vmul.f32 %v577, 1.442695
    %v579 = vpow.pop %v578
    %v580 = vadd.f32 %v579, 1.0
    %v581 = vrcp.pop %v580
    %v582 = vmul.f32 1.0, %v581
    %v583 = vmul.f32 %v575, %v280
    %v584 = vmul.f32 %v569, %v576
    %v585 = vadd.f32 %v583, %v584
    %v586 = vtanh.pop %v585
    %v587 = vmul.f32 %v582, %v586
    %s588 = scalar_lea.vmem [#allocation2], 32
    %v589 = vld [vmem:[%s588] sm:$0xff]
    %v590 = vld [vmem:[%s588 + $0x8] sm:$0xff]
    %v591 = vld [vmem:[%s588 + $0x10] sm:$0xff]
    %v592 = vld [vmem:[%s588 + $0x18] sm:$0xff]
    %v593 = vpack.c.bf16 %v587, %v587
    %594 = vmatprep.subr.bf16.mxu0 %v415
    %595 = vmatpush1.bf16.msra.mxu0 %v414
    %596 = vmatprep.subr.bf16.mxu0 %v419
    %597 = vmatpush1.bf16.msra.mxu0 %v418
    %598 = vmatprep.subr.bf16.mxu0 %v423
    %599 = vmatpush1.bf16.msra.mxu0 %v422
    %600 = vmatprep.subr.bf16.mxu0 %v427
    %601 = vmatpush1.bf16.msra.mxu0 %v426
    %602 = vmatprep.subr.bf16.mxu0 %v431
    %603 = vmatpush1.bf16.msra.mxu0 %v430
    %604 = vmatprep.subr.bf16.mxu0 %v435
    %605 = vmatpush1.bf16.msra.mxu0 %v434
    %606 = vmatprep.subr.bf16.mxu0 %v439
    %607 = vmatpush1.bf16.msra.mxu0 %v438
    %608 = vmatprep.subr.bf16.mxu0 %v443
    %609 = vmatpush1.bf16.msra.mxu0 %v442
    %610 = vmatprep.subr.bf16.mxu0 0
    %611 = vmatpush1.bf16.msra.mxu0 0
    %612 = vmatprep.subr.bf16.mxu0 0
    %613 = vmatpush1.bf16.msra.mxu0 0
    %614 = vmatprep.subr.bf16.mxu0 0
    %615 = vmatpush1.bf16.msra.mxu0 0
    %616 = vmatprep.subr.bf16.mxu0 0
    %617 = vmatpush1.bf16.msra.mxu0 0
    %618 = vmatprep.subr.bf16.mxu0 0
    %619 = vmatpush1.bf16.msra.mxu0 0
    %620 = vmatprep.subr.bf16.mxu0 0
    %621 = vmatpush1.bf16.msra.mxu0 0
    %622 = vmatprep.subr.bf16.mxu0 0
    %623 = vmatpush1.bf16.msra.mxu0 0
    %624 = vmatprep.subr.bf16.mxu0 0
    %625 = vmatpush1.bf16.msra.mxu0 0
    %626 = vmatprep.mubr.bf16.mxu0 0
    %627 = vmatmul.mubr.bf16.gmra.mrb[0].mxu0 %v593
    %v628 = vpop.f32.mrb[0].mxu0
    %v629 = vadd.f32 0.0, %v628
    %v630 = vpop.f32.mrb[0].mxu0
    %v631 = vadd.f32 0.0, %v630
    %v632 = vpop.f32.mrb[0].mxu0
    %v633 = vpop.f32.mrb[0].mxu0
    %634 = vdwg.mxu0
    %635 = vmatprep.subr.bf16.mxu0 %v417
    %636 = vmatpush1.bf16.msra.mxu0 %v416
    %637 = vmatprep.subr.bf16.mxu0 %v421
    %638 = vmatpush1.bf16.msra.mxu0 %v420
    %639 = vmatprep.subr.bf16.mxu0 %v425
    %640 = vmatpush1.bf16.msra.mxu0 %v424
    %641 = vmatprep.subr.bf16.mxu0 %v429
    %642 = vmatpush1.bf16.msra.mxu0 %v428
    %643 = vmatprep.subr.bf16.mxu0 %v433
    %644 = vmatpush1.bf16.msra.mxu0 %v432
    %645 = vmatprep.subr.bf16.mxu0 %v437
    %646 = vmatpush1.bf16.msra.mxu0 %v436
    %647 = vmatprep.subr.bf16.mxu0 %v441
    %648 = vmatpush1.bf16.msra.mxu0 %v440
    %649 = vmatprep.subr.bf16.mxu0 %v445
    %650 = vmatpush1.bf16.msra.mxu0 %v444
    %651 = vmatprep.subr.bf16.mxu0 0
    %652 = vmatpush1.bf16.msra.mxu0 0
    %653 = vmatprep.subr.bf16.mxu0 0
    %654 = vmatpush1.bf16.msra.mxu0 0
    %655 = vmatprep.subr.bf16.mxu0 0
    %656 = vmatpush1.bf16.msra.mxu0 0
    %657 = vmatprep.subr.bf16.mxu0 0
    %658 = vmatpush1.bf16.msra.mxu0 0
    %659 = vmatprep.subr.bf16.mxu0 0
    %660 = vmatpush1.bf16.msra.mxu0 0
    %661 = vmatprep.subr.bf16.mxu0 0
    %662 = vmatpush1.bf16.msra.mxu0 0
    %663 = vmatprep.subr.bf16.mxu0 0
    %664 = vmatpush1.bf16.msra.mxu0 0
    %665 = vmatprep.subr.bf16.mxu0 0
    %666 = vmatpush1.bf16.msra.mxu0 0
    %667 = vmatprep.mubr.bf16.mxu0 0
    %668 = vmatmul.mubr.bf16.gmra.mrb[0].mxu0 %v593
    %v669 = vpop.f32.mrb[0].mxu0
    %v670 = vadd.f32 0.0, %v669
    %v671 = vpop.f32.mrb[0].mxu0
    %v672 = vadd.f32 0.0, %v671
    %v673 = vpop.f32.mrb[0].mxu0
    %v674 = vpop.f32.mrb[0].mxu0
    %675 = vdwg.mxu0
    %v676 = vadd.f32 %v589, %v629
    %v677 = vadd.f32 %v590, %v631
    %v678 = vadd.f32 %v591, %v670
    %v679 = vadd.f32 %v592, %v672
    %v680 = vxor.u32 %v676, 2147483648
    %v681 = vmul.f32 %v680, 1.442695
    %v682 = vpow.pop %v681
    %v683 = vadd.f32 %v682, 1.0
    %v684 = vrcp.pop %v683
    %v685 = vmul.f32 1.0, %v684
    %v686 = vxor.u32 %v677, 2147483648
    %v687 = vmul.f32 %v686, 1.442695
    %v688 = vpow.pop %v687
    %v689 = vadd.f32 %v688, 1.0
    %v690 = vrcp.pop %v689
    %v691 = vmul.f32 1.0, %v690
    %v692 = vtanh.pop %v678
    %v693 = vxor.u32 %v679, 2147483648
    %v694 = vmul.f32 %v693, 1.442695
    %v695 = vpow.pop %v694
    %v696 = vadd.f32 %v695, 1.0
    %v697 = vrcp.pop %v696
    %v698 = vmul.f32 1.0, %v697
    %v699 = vmul.f32 %v691, %v585
    %v700 = vmul.f32 %v685, %v692
    %v701 = vadd.f32 %v699, %v700
    %v702 = vtanh.pop %v701
    %v703 = vmul.f32 %v698, %v702
    %s704 = scalar_lea.vmem [#allocation2], 64
    %v705 = vld [vmem:[%s704] sm:$0xff]
    %v706 = vld [vmem:[%s704 + $0x8] sm:$0xff]
    %v707 = vld [vmem:[%s704 + $0x10] sm:$0xff]
    %v708 = vld [vmem:[%s704 + $0x18] sm:$0xff]
    %v709 = vpack.c.bf16 %v703, %v703
    %710 = vmatprep.subr.bf16.mxu0 %v415
    %711 = vmatpush1.bf16.msra.mxu0 %v414
    %712 = vmatprep.subr.bf16.mxu0 %v419
    %713 = vmatpush1.bf16.msra.mxu0 %v418
    %714 = vmatprep.subr.bf16.mxu0 %v423
    %715 = vmatpush1.bf16.msra.mxu0 %v422
    %716 = vmatprep.subr.bf16.mxu0 %v427
    %717 = vmatpush1.bf16.msra.mxu0 %v426
    %718 = vmatprep.subr.bf16.mxu0 %v431
    %719 = vmatpush1.bf16.msra.mxu0 %v430
    %720 = vmatprep.subr.bf16.mxu0 %v435
    %721 = vmatpush1.bf16.msra.mxu0 %v434
    %722 = vmatprep.subr.bf16.mxu0 %v439
    %723 = vmatpush1.bf16.msra.mxu0 %v438
    %724 = vmatprep.subr.bf16.mxu0 %v443
    %725 = vmatpush1.bf16.msra.mxu0 %v442
    %726 = vmatprep.subr.bf16.mxu0 0
    %727 = vmatpush1.bf16.msra.mxu0 0
    %728 = vmatprep.subr.bf16.mxu0 0
    %729 = vmatpush1.bf16.msra.mxu0 0
    %730 = vmatprep.subr.bf16.mxu0 0
    %731 = vmatpush1.bf16.msra.mxu0 0
    %732 = vmatprep.subr.bf16.mxu0 0
    %733 = vmatpush1.bf16.msra.mxu0 0
    %734 = vmatprep.subr.bf16.mxu0 0
    %735 = vmatpush1.bf16.msra.mxu0 0
    %736 = vmatprep.subr.bf16.mxu0 0
    %737 = vmatpush1.bf16.msra.mxu0 0
    %738 = vmatprep.subr.bf16.mxu0 0
    %739 = vmatpush1.bf16.msra.mxu0 0
    %740 = vmatprep.subr.bf16.mxu0 0
    %741 = vmatpush1.bf16.msra.mxu0 0
    %742 = vmatprep.mubr.bf16.mxu0 0
    %743 = vmatmul.mubr.bf16.gmra.mrb[0].mxu0 %v709
    %v744 = vpop.f32.mrb[0].mxu0
    %v745 = vadd.f32 0.0, %v744
    %v746 = vpop.f32.mrb[0].mxu0
    %v747 = vadd.f32 0.0, %v746
    %v748 = vpop.f32.mrb[0].mxu0
    %v749 = vpop.f32.mrb[0].mxu0
    %750 = vdwg.mxu0
    %751 = vmatprep.subr.bf16.mxu0 %v417
    %752 = vmatpush1.bf16.msra.mxu0 %v416
    %753 = vmatprep.subr.bf16.mxu0 %v421
    %754 = vmatpush1.bf16.msra.mxu0 %v420
    %755 = vmatprep.subr.bf16.mxu0 %v425
    %756 = vmatpush1.bf16.msra.mxu0 %v424
    %757 = vmatprep.subr.bf16.mxu0 %v429
    %758 = vmatpush1.bf16.msra.mxu0 %v428
    %759 = vmatprep.subr.bf16.mxu0 %v433
    %760 = vmatpush1.bf16.msra.mxu0 %v432
    %761 = vmatprep.subr.bf16.mxu0 %v437
    %762 = vmatpush1.bf16.msra.mxu0 %v436
    %763 = vmatprep.subr.bf16.mxu0 %v441
    %764 = vmatpush1.bf16.msra.mxu0 %v440
    %765 = vmatprep.subr.bf16.mxu0 %v445
    %766 = vmatpush1.bf16.msra.mxu0 %v444
    %767 = vmatprep.subr.bf16.mxu0 0
    %768 = vmatpush1.bf16.msra.mxu0 0
    %769 = vmatprep.subr.bf16.mxu0 0
    %770 = vmatpush1.bf16.msra.mxu0 0
    %771 = vmatprep.subr.bf16.mxu0 0
    %772 = vmatpush1.bf16.msra.mxu0 0
    %773 = vmatprep.subr.bf16.mxu0 0
    %774 = vmatpush1.bf16.msra.mxu0 0
    %775 = vmatprep.subr.bf16.mxu0 0
    %776 = vmatpush1.bf16.msra.mxu0 0
    %777 = vmatprep.subr.bf16.mxu0 0
    %778 = vmatpush1.bf16.msra.mxu0 0
    %779 = vmatprep.subr.bf16.mxu0 0
    %780 = vmatpush1.bf16.msra.mxu0 0
    %781 = vmatprep.subr.bf16.mxu0 0
    %782 = vmatpush1.bf16.msra.mxu0 0
    %783 = vmatprep.mubr.bf16.mxu0 0
    %784 = vmatmul.mubr.bf16.gmra.mrb[0].mxu0 %v709
    %v785 = vpop.f32.mrb[0].mxu0
    %v786 = vadd.f32 0.0, %v785
    %v787 = vpop.f32.mrb[0].mxu0
    %v788 = vadd.f32 0.0, %v787
    %v789 = vpop.f32.mrb[0].mxu0
    %v790 = vpop.f32.mrb[0].mxu0
    %791 = vdwg.mxu0
    %v792 = vadd.f32 %v705, %v745
    %v793 = vadd.f32 %v706, %v747
    %v794 = vadd.f32 %v707, %v786
    %v795 = vadd.f32 %v708, %v788
    %v796 = vxor.u32 %v792, 2147483648
    %v797 = vmul.f32 %v796, 1.442695
    %v798 = vpow.pop %v797
    %v799 = vadd.f32 %v798, 1.0
    %v800 = vrcp.pop %v799
    %v801 = vmul.f32 1.0, %v800
    %v802 = vxor.u32 %v793, 2147483648
    %v803 = vmul.f32 %v802, 1.442695
    %v804 = vpow.pop %v803
    %v805 = vadd.f32 %v804, 1.0
    %v806 = vrcp.pop %v805
    %v807 = vmul.f32 1.0, %v806
    %v808 = vtanh.pop %v794
    %v809 = vxor.u32 %v795, 2147483648
    %v810 = vmul.f32 %v809, 1.442695
    %v811 = vpow.pop %v810
    %v812 = vadd.f32 %v811, 1.0
    %v813 = vrcp.pop %v812
    %v814 = vmul.f32 1.0, %v813
    %v815 = vmul.f32 %v807, %v701
    %v816 = vmul.f32 %v801, %v808
    %v817 = vadd.f32 %v815, %v816
    %v818 = vtanh.pop %v817
    %v819 = vmul.f32 %v814, %v818
    %s820 = scalar_lea.vmem [#allocation2], 96
    %v821 = vld [vmem:[%s820] sm:$0xff]
    %v822 = vld [vmem:[%s820 + $0x8] sm:$0xff]
    %v823 = vld [vmem:[%s820 + $0x10] sm:$0xff]
    %v824 = vld [vmem:[%s820 + $0x18] sm:$0xff]
    %v825 = vpack.c.bf16 %v819, %v819
    %826 = vmatprep.subr.bf16.mxu0 %v415
    %827 = vmatpush1.bf16.msra.mxu0 %v414
    %828 = vmatprep.subr.bf16.mxu0 %v419
    %829 = vmatpush1.bf16.msra.mxu0 %v418
    %830 = vmatprep.subr.bf16.mxu0 %v423
    %831 = vmatpush1.bf16.msra.mxu0 %v422
    %832 = vmatprep.subr.bf16.mxu0 %v427
    %833 = vmatpush1.bf16.msra.mxu0 %v426
    %834 = vmatprep.subr.bf16.mxu0 %v431
    %835 = vmatpush1.bf16.msra.mxu0 %v430
    %836 = vmatprep.subr.bf16.mxu0 %v435
    %837 = vmatpush1.bf16.msra.mxu0 %v434
    %838 = vmatprep.subr.bf16.mxu0 %v439
    %839 = vmatpush1.bf16.msra.mxu0 %v438
    %840 = vmatprep.subr.bf16.mxu0 %v443
    %841 = vmatpush1.bf16.msra.mxu0 %v442
    %842 = vmatprep.subr.bf16.mxu0 0
    %843 = vmatpush1.bf16.msra.mxu0 0
    %844 = vmatprep.subr.bf16.mxu0 0
    %845 = vmatpush1.bf16.msra.mxu0 0
    %846 = vmatprep.subr.bf16.mxu0 0
    %847 = vmatpush1.bf16.msra.mxu0 0
    %848 = vmatprep.subr.bf16.mxu0 0
    %849 = vmatpush1.bf16.msra.mxu0 0
    %850 = vmatprep.subr.bf16.mxu0 0
    %851 = vmatpush1.bf16.msra.mxu0 0
    %852 = vmatprep.subr.bf16.mxu0 0
    %853 = vmatpush1.bf16.msra.mxu0 0
    %854 = vmatprep.subr.bf16.mxu0 0
    %855 = vmatpush1.bf16.msra.mxu0 0
    %856 = vmatprep.subr.bf16.mxu0 0
    %857 = vmatpush1.bf16.msra.mxu0 0
    %858 = vmatprep.mubr.bf16.mxu0 0
    %859 = vmatmul.mubr.bf16.gmra.mrb[0].mxu0 %v825
    %v860 = vpop.f32.mrb[0].mxu0
    %v861 = vadd.f32 0.0, %v860
    %v862 = vpop.f32.mrb[0].mxu0
    %v863 = vadd.f32 0.0, %v862
    %v864 = vpop.f32.mrb[0].mxu0
    %v865 = vpop.f32.mrb[0].mxu0
    %866 = vdwg.mxu0
    %867 = vmatprep.subr.bf16.mxu0 %v417
    %868 = vmatpush1.bf16.msra.mxu0 %v416
    %869 = vmatprep.subr.bf16.mxu0 %v421
    %870 = vmatpush1.bf16.msra.mxu0 %v420
    %871 = vmatprep.subr.bf16.mxu0 %v425
    %872 = vmatpush1.bf16.msra.mxu0 %v424
    %873 = vmatprep.subr.bf16.mxu0 %v429
    %874 = vmatpush1.bf16.msra.mxu0 %v428
    %875 = vmatprep.subr.bf16.mxu0 %v433
    %876 = vmatpush1.bf16.msra.mxu0 %v432
    %877 = vmatprep.subr.bf16.mxu0 %v437
    %878 = vmatpush1.bf16.msra.mxu0 %v436
    %879 = vmatprep.subr.bf16.mxu0 %v441
    %880 = vmatpush1.bf16.msra.mxu0 %v440
    %881 = vmatprep.subr.bf16.mxu0 %v445
    %882 = vmatpush1.bf16.msra.mxu0 %v444
    %883 = vmatprep.subr.bf16.mxu0 0
    %884 = vmatpush1.bf16.msra.mxu0 0
    %885 = vmatprep.subr.bf16.mxu0 0
    %886 = vmatpush1.bf16.msra.mxu0 0
    %887 = vmatprep.subr.bf16.mxu0 0
    %888 = vmatpush1.bf16.msra.mxu0 0
    %889 = vmatprep.subr.bf16.mxu0 0
    %890 = vmatpush1.bf16.msra.mxu0 0
    %891 = vmatprep.subr.bf16.mxu0 0
    %892 = vmatpush1.bf16.msra.mxu0 0
    %893 = vmatprep.subr.bf16.mxu0 0
    %894 = vmatpush1.bf16.msra.mxu0 0
    %895 = vmatprep.subr.bf16.mxu0 0
    %896 = vmatpush1.bf16.msra.mxu0 0
    %897 = vmatprep.subr.bf16.mxu0 0
    %898 = vmatpush1.bf16.msra.mxu0 0
    %899 = vmatprep.mubr.bf16.mxu0 0
    %900 = vmatmul.mubr.bf16.gmra.mrb[0].mxu0 %v825
    %v901 = vpop.f32.mrb[0].mxu0
    %v902 = vadd.f32 0.0, %v901
    %v903 = vpop.f32.mrb[0].mxu0
    %v904 = vadd.f32 0.0, %v903
    %v905 = vpop.f32.mrb[0].mxu0
    %v906 = vpop.f32.mrb[0].mxu0
    %907 = vdwg.mxu0
    %v908 = vadd.f32 %v821, %v861
    %v909 = vadd.f32 %v822, %v863
    %v910 = vadd.f32 %v823, %v902
    %v911 = vadd.f32 %v824, %v904
    %v912 = vxor.u32 %v908, 2147483648
    %v913 = vmul.f32 %v912, 1.442695
    %v914 = vpow.pop %v913
    %v915 = vadd.f32 %v914, 1.0
    %v916 = vrcp.pop %v915
    %v917 = vmul.f32 1.0, %v916
    %v918 = vxor.u32 %v909, 2147483648
    %v919 = vmul.f32 %v918, 1.442695
    %v920 = vpow.pop %v919
    %v921 = vadd.f32 %v920, 1.0
    %v922 = vrcp.pop %v921
    %v923 = vmul.f32 1.0, %v922
    %v924 = vtanh.pop %v910
    %v925 = vxor.u32 %v911, 2147483648
    %v926 = vmul.f32 %v925, 1.442695
    %v927 = vpow.pop %v926
    %v928 = vadd.f32 %v927, 1.0
    %v929 = vrcp.pop %v928
    %v930 = vmul.f32 1.0, %v929
    %v931 = vmul.f32 %v923, %v817
    %v932 = vmul.f32 %v917, %v924
    %v933 = vadd.f32 %v931, %v932
    %v934 = vtanh.pop %v933
    %v935 = vmul.f32 %v930, %v934
    %936 = vst [vmem:[#allocation3] sm:$0xff] %v935
    %937 = vst [vmem:[#allocation4] sm:$0xff] %v933
    // Predicated region
    $region34: #{tpu_custom_call.1} parent=1 // pred_check
      %p938 = pneg %p60
    $region35: #{tpu_custom_call.1} parent=1 // pred_check_branch
      %940 = sbr.rel (%p938) target = $region37
    $region36: #{tpu_custom_call.1} parent=1 // pred_region
      %941 = vst [vmem:[#allocation11] sm:$0xff] %v935
    $region37: #{tpu_custom_call.1} parent=1 // pred_fallthru
      _
    // Predicated region
    $region38: #{tpu_custom_call.1} parent=1 // pred_check
      _
    $region39: #{tpu_custom_call.1} parent=1 // pred_check_branch
      %943 = sbr.rel (0) target = $region41
    $region40: #{tpu_custom_call.1} parent=1 // pred_region
      %s945 = ssub.s32 128, 128
      %946 = vsyncadd [#allocation7], %s945
      %s948 = sshll.u32 [#allocation11], 4
      %s949 = int_to_ptr.vmem [resolvable:$true] %s948
      %951 = dma.vmem_to_hbm [thread:$0]  %s949, 128, %s4, [#allocation7]
    $region41: #{tpu_custom_call.1} parent=1 // pred_fallthru
      _
    // Predicated region
    $region42: #{tpu_custom_call.1} parent=1 // pred_check
      _
    $region43: #{tpu_custom_call.1} parent=1 // pred_check_branch
      %953 = sbr.rel (0) target = $region45
    $region44: #{tpu_custom_call.1} parent=1 // pred_region
      %954 = dma.done [#allocation7], 128
    $region45: #{tpu_custom_call.1} parent=1 // pred_fallthru
      _
    %955 = vsyncpa [#allocation6], 1
    %956 = vsyncpa [#allocation9], 1
    %957 = vsyncpa [#allocation7], 1

</llo_original>
